<compile_context>
chip_gen: v7x
topology: tpu7x:2x2x1
jax: 0.10.0
libtpu: 0.0.40
codegen_flags: <defaults>
</compile_context>

<pallas_src>
import jax
import jax.numpy as jnp
from jax.experimental import pallas as pl
from jax.experimental.pallas import tpu as pltpu


def _round_up(a, b):
    return ((a + b - 1) // b) * b


def _linear_kernel(w_ref, b_ref, x_ref, o_ref):
    """y[j] = b[j] + sum_k W[j, k] * x[k]   (VPU broadcast-FMAs).

    x_ref / o_ref : (F, tile_rb, 128) VMEM tiles -> x_ref[k] is a dense
                    (tile_rb, 128) value (full (8,128) vregs).
    w_ref         : (F, F) in SMEM, read as scalars.
    b_ref         : (F,)   in SMEM, read as scalars.
    """
    f = o_ref.shape[0]
    # Hoist the F input-row loads out of the output loop (load each once).
    xs = [x_ref[k] for k in range(f)]           # static unroll, F is tiny
    for j in range(f):
        acc = xs[0] * w_ref[j, 0] + b_ref[j]    # init accumulator with bias
        for k in range(1, f):
            acc = acc + xs[k] * w_ref[j, k]
        o_ref[j] = acc.astype(o_ref.dtype)


def naive_linear_forward(x, weight, bias, *, tile_row_blocks=1024):
    """Pallas implementation of NaiveLinear.forward.

    x:      (..., F)  float32
    weight: (F, F)    float32
    bias:   (F,)      float32
    returns (y, logabsdet) with y.shape == x.shape
    """
    f = weight.shape[0]
    lead_shape = x.shape[:-1]
    x2 = x.reshape(-1, f)
    n = x2.shape[0]

    # Channel-major, lane-dense layout: features lead, rows fill full
    # (sublane, lane) = (row-block, 128) tiles.
    n128 = _round_up(max(n, 1), 128)
    xT = x2.T                                   # (f, n)
    if n128 != n:
        xT = jnp.pad(xT, ((0, 0), (0, n128 - n)))
    nb = n128 // 128
    xb = xT.reshape(f, nb, 128)                 # contiguous reshape (free)

    # Row-block tile: (f, tile_rb, 128) f32 = tile_rb * 1.5 KiB per buffer.
    # Default 1024 -> 1.5 MiB/buffer, 6 MiB double-buffered in+out: fits the
    # default scoped VMEM on v5e/v6e/v7x.  Shrink for small inputs so the
    # parallel grid axis still has ~4 steps (megacore balance), keeping the
    # second-to-last block dim a multiple of 8 or the full extent.
    tile_rb = tile_row_blocks
    if nb < 4 * tile_rb:
        tile_rb = max(8, _round_up(-(-nb // 4), 8))
        if tile_rb > nb:
            tile_rb = nb                        # full extent (always legal)

    grid = (pl.cdiv(nb, tile_rb),)

    flops = 2 * n128 * f * f
    bytes_accessed = int((2 * n128 * f + f * f + f) * xb.dtype.itemsize)

    yb = pl.pallas_call(
        _linear_kernel,
        out_shape=jax.ShapeDtypeStruct((f, nb, 128), x.dtype),
        grid=grid,
        in_specs=[
            pl.BlockSpec(memory_space=pltpu.MemorySpace.SMEM),      # W (f, f)
            pl.BlockSpec(memory_space=pltpu.MemorySpace.SMEM),      # b (f,)
            pl.BlockSpec((f, tile_rb, 128), lambda i: (0, i, 0)),   # x tile
        ],
        out_specs=pl.BlockSpec((f, tile_rb, 128), lambda i: (0, i, 0)),
        compiler_params=pltpu.CompilerParams(
            dimension_semantics=("parallel",)),
        cost_estimate=pl.CostEstimate(
            flops=flops, transcendentals=0, bytes_accessed=bytes_accessed),
    )(weight, bias, xb)

    y = yb.reshape(f, n128)[:, :n].T.reshape(*lead_shape, f)

    # torch.slogdet(W)[1]  ->  log |det W|
    logabsdet = jnp.linalg.slogdet(weight)[1]
    return y, logabsdet


if __name__ == "__main__":
    features = 3                      # module default
    stdv = 1.0 / (8.0 ** 0.5)         # matches nn.init.uniform_(-stdv, stdv)

    key = jax.random.PRNGKey(0)
    k_w, k_x = jax.random.split(key)

    # Deterministic parameter init (synthetic, no checkpoint load).
    weight = jax.random.uniform(
        k_w, (features, features), jnp.float32, minval=-stdv, maxval=stdv)
    bias = jnp.zeros((features,), jnp.float32)

    # Small input consistent with F.linear's (..., in_features) contract.
    x = jax.random.normal(k_x, (2, 16, 16, features), dtype=jnp.float32)

    fwd = jax.jit(naive_linear_forward)
    y, logdet = fwd(x, weight, bias)
    y = jax.block_until_ready(y)
    logdet = jax.block_until_ready(logdet)

    # Pure-JAX reference check (including a non-128-aligned tail case).
    y_ref = x @ weight.T + bias
    logdet_ref = jnp.linalg.slogdet(weight)[1]
    assert y.shape == x.shape
    assert jnp.allclose(y, y_ref, atol=1e-5, rtol=1e-5)
    assert jnp.allclose(logdet, logdet_ref, atol=1e-6)

    x_tail = jax.random.normal(jax.random.PRNGKey(1), (5, 7, features),
                               dtype=jnp.float32)
    y_tail, _ = naive_linear_forward(x_tail, weight, bias)
    assert jnp.allclose(jax.block_until_ready(y_tail),
                        x_tail @ weight.T + bias, atol=1e-5, rtol=1e-5)

    print("KERNEL_OK")
</pallas_src>

<mosaic_0001>
module attributes {stable_mosaic.version = 11 : i64} {
  func.func @_linear_kernel(%arg0: i32, %arg1: memref<3x3xf32, #tpu.memory_space<smem>>, %arg2: memref<3xf32, #tpu.memory_space<smem>>, %arg3: memref<3x4x128xf32, #tpu.memory_space<vmem>>, %arg4: memref<3x4x128xf32, #tpu.memory_space<vmem>>) attributes {dimension_semantics = [#tpu.dimension_semantics<parallel>], iteration_bounds = array<i64: 1>, scalar_prefetch = 0 : i64, scratch_operands = 0 : i64, tpu.core_type = #tpu.core_type<tc>, window_params = [{transform_indices = @transform_0, window_bounds = array<i64: 3, 3>}, {transform_indices = @transform_1, window_bounds = array<i64: 3>}, {transform_indices = @transform_2, window_bounds = array<i64: 3, 4, 128>}, {transform_indices = @transform_3, window_bounds = array<i64: 3, 4, 128>}]} {
    %c0 = arith.constant 0 : index
    %c0_0 = arith.constant 0 : index
    %c0_1 = arith.constant 0 : index
    %0 = vector.load %arg3[%c0, %c0_0, %c0_1] : memref<3x4x128xf32, #tpu.memory_space<vmem>>, vector<1x4x128xf32>
    %1 = vector.shape_cast %0 : vector<1x4x128xf32> to vector<4x128xf32>
    %c1 = arith.constant 1 : index
    %c0_2 = arith.constant 0 : index
    %c0_3 = arith.constant 0 : index
    %2 = vector.load %arg3[%c1, %c0_2, %c0_3] : memref<3x4x128xf32, #tpu.memory_space<vmem>>, vector<1x4x128xf32>
    %3 = vector.shape_cast %2 : vector<1x4x128xf32> to vector<4x128xf32>
    %c2 = arith.constant 2 : index
    %c0_4 = arith.constant 0 : index
    %c0_5 = arith.constant 0 : index
    %4 = vector.load %arg3[%c2, %c0_4, %c0_5] : memref<3x4x128xf32, #tpu.memory_space<vmem>>, vector<1x4x128xf32>
    %5 = vector.shape_cast %4 : vector<1x4x128xf32> to vector<4x128xf32>
    %c0_6 = arith.constant 0 : index
    %c0_7 = arith.constant 0 : index
    %6 = memref.load %arg1[%c0_6, %c0_7] : memref<3x3xf32, #tpu.memory_space<smem>>
    %7 = vector.broadcast %6 : f32 to vector<4x128xf32>
    %8 = arith.mulf %1, %7 : vector<4x128xf32>
    %c0_8 = arith.constant 0 : index
    %9 = memref.load %arg2[%c0_8] : memref<3xf32, #tpu.memory_space<smem>>
    %10 = vector.broadcast %9 : f32 to vector<4x128xf32>
    %11 = arith.addf %8, %10 : vector<4x128xf32>
    %c0_9 = arith.constant 0 : index
    %c1_10 = arith.constant 1 : index
    %12 = memref.load %arg1[%c0_9, %c1_10] : memref<3x3xf32, #tpu.memory_space<smem>>
    %13 = vector.broadcast %12 : f32 to vector<4x128xf32>
    %14 = arith.mulf %3, %13 : vector<4x128xf32>
    %15 = arith.addf %11, %14 : vector<4x128xf32>
    %c0_11 = arith.constant 0 : index
    %c2_12 = arith.constant 2 : index
    %16 = memref.load %arg1[%c0_11, %c2_12] : memref<3x3xf32, #tpu.memory_space<smem>>
    %17 = vector.broadcast %16 : f32 to vector<4x128xf32>
    %18 = arith.mulf %5, %17 : vector<4x128xf32>
    %19 = arith.addf %15, %18 : vector<4x128xf32>
    %c0_13 = arith.constant 0 : index
    %c0_14 = arith.constant 0 : index
    %c0_15 = arith.constant 0 : index
    %20 = vector.load %arg4[%c0_13, %c0_14, %c0_15] : memref<3x4x128xf32, #tpu.memory_space<vmem>>, vector<1x4x128xf32>
    %21 = vector.shape_cast %20 : vector<1x4x128xf32> to vector<4x128xf32>
    %22 = vector.shape_cast %19 : vector<4x128xf32> to vector<1x4x128xf32>
    tpu.vector_store %arg4[%c0_13, %c0_14, %c0_15], %22 {strides = array<i32>} : memref<3x4x128xf32, #tpu.memory_space<vmem>>, vector<1x4x128xf32>,
    %c1_16 = arith.constant 1 : index
    %c0_17 = arith.constant 0 : index
    %23 = memref.load %arg1[%c1_16, %c0_17] : memref<3x3xf32, #tpu.memory_space<smem>>
    %24 = vector.broadcast %23 : f32 to vector<4x128xf32>
    %25 = arith.mulf %1, %24 : vector<4x128xf32>
    %c1_18 = arith.constant 1 : index
    %26 = memref.load %arg2[%c1_18] : memref<3xf32, #tpu.memory_space<smem>>
    %27 = vector.broadcast %26 : f32 to vector<4x128xf32>
    %28 = arith.addf %25, %27 : vector<4x128xf32>
    %c1_19 = arith.constant 1 : index
    %c1_20 = arith.constant 1 : index
    %29 = memref.load %arg1[%c1_19, %c1_20] : memref<3x3xf32, #tpu.memory_space<smem>>
    %30 = vector.broadcast %29 : f32 to vector<4x128xf32>
    %31 = arith.mulf %3, %30 : vector<4x128xf32>
    %32 = arith.addf %28, %31 : vector<4x128xf32>
    %c1_21 = arith.constant 1 : index
    %c2_22 = arith.constant 2 : index
    %33 = memref.load %arg1[%c1_21, %c2_22] : memref<3x3xf32, #tpu.memory_space<smem>>
    %34 = vector.broadcast %33 : f32 to vector<4x128xf32>
    %35 = arith.mulf %5, %34 : vector<4x128xf32>
    %36 = arith.addf %32, %35 : vector<4x128xf32>
    %c1_23 = arith.constant 1 : index
    %c0_24 = arith.constant 0 : index
    %c0_25 = arith.constant 0 : index
    %37 = vector.load %arg4[%c1_23, %c0_24, %c0_25] : memref<3x4x128xf32, #tpu.memory_space<vmem>>, vector<1x4x128xf32>
    %38 = vector.shape_cast %37 : vector<1x4x128xf32> to vector<4x128xf32>
    %39 = vector.shape_cast %36 : vector<4x128xf32> to vector<1x4x128xf32>
    tpu.vector_store %arg4[%c1_23, %c0_24, %c0_25], %39 {strides = array<i32>} : memref<3x4x128xf32, #tpu.memory_space<vmem>>, vector<1x4x128xf32>,
    %c2_26 = arith.constant 2 : index
    %c0_27 = arith.constant 0 : index
    %40 = memref.load %arg1[%c2_26, %c0_27] : memref<3x3xf32, #tpu.memory_space<smem>>
    %41 = vector.broadcast %40 : f32 to vector<4x128xf32>
    %42 = arith.mulf %1, %41 : vector<4x128xf32>
    %c2_28 = arith.constant 2 : index
    %43 = memref.load %arg2[%c2_28] : memref<3xf32, #tpu.memory_space<smem>>
    %44 = vector.broadcast %43 : f32 to vector<4x128xf32>
    %45 = arith.addf %42, %44 : vector<4x128xf32>
    %c2_29 = arith.constant 2 : index
    %c1_30 = arith.constant 1 : index
    %46 = memref.load %arg1[%c2_29, %c1_30] : memref<3x3xf32, #tpu.memory_space<smem>>
    %47 = vector.broadcast %46 : f32 to vector<4x128xf32>
    %48 = arith.mulf %3, %47 : vector<4x128xf32>
    %49 = arith.addf %45, %48 : vector<4x128xf32>
    %c2_31 = arith.constant 2 : index
    %c2_32 = arith.constant 2 : index
    %50 = memref.load %arg1[%c2_31, %c2_32] : memref<3x3xf32, #tpu.memory_space<smem>>
    %51 = vector.broadcast %50 : f32 to vector<4x128xf32>
    %52 = arith.mulf %5, %51 : vector<4x128xf32>
    %53 = arith.addf %49, %52 : vector<4x128xf32>
    %c2_33 = arith.constant 2 : index
    %c0_34 = arith.constant 0 : index
    %c0_35 = arith.constant 0 : index
    %54 = vector.load %arg4[%c2_33, %c0_34, %c0_35] : memref<3x4x128xf32, #tpu.memory_space<vmem>>, vector<1x4x128xf32>
    %55 = vector.shape_cast %54 : vector<1x4x128xf32> to vector<4x128xf32>
    %56 = vector.shape_cast %53 : vector<4x128xf32> to vector<1x4x128xf32>
    tpu.vector_store %arg4[%c2_33, %c0_34, %c0_35], %56 {strides = array<i32>} : memref<3x4x128xf32, #tpu.memory_space<vmem>>, vector<1x4x128xf32>,
    return
  }
  func.func @transform_0(%arg0: i32) -> (i32, i32) {
    %c0_i32 = arith.constant 0 : i32
    %c0_i32_0 = arith.constant 0 : i32
    %c0_i32_1 = arith.constant 0 : i32
    return %c0_i32, %c0_i32_0 : i32, i32
  }
  func.func @transform_1(%arg0: i32) -> i32 {
    %c0_i32 = arith.constant 0 : i32
    %c0_i32_0 = arith.constant 0 : i32
    return %c0_i32 : i32
  }
  func.func @transform_2(%arg0: i32) -> (i32, i32, i32) {
    %c0_i32 = arith.constant 0 : i32
    %c0_i32_0 = arith.constant 0 : i32
    %c0_i32_1 = arith.constant 0 : i32
    return %c0_i32, %arg0, %c0_i32_0 : i32, i32, i32
  }
  func.func @transform_3(%arg0: i32) -> (i32, i32, i32) {
    %c0_i32 = arith.constant 0 : i32
    %c0_i32_0 = arith.constant 0 : i32
    %c0_i32_1 = arith.constant 0 : i32
    return %c0_i32, %arg0, %c0_i32_0 : i32, i32, i32
  }
}

</mosaic_0001>

<llo_original>
// kernel: custom-call.2
$region0: #{custom-call.2}
  %s0 = inlined_call_operand.vmem [shape: f32[3,3], index: 0, kind: input, shape index: {}]
  %s1 = inlined_call_operand.vmem [shape: f32[3,3], index: 1, kind: output, shape index: {0}]
  %s2 = inlined_call_operand.hbm [shape: s32[3], index: 2, kind: output, shape index: {1}]
  %s3 = inlined_call_operand.hbm [shape: s32[3], index: 3, kind: output, shape index: {2}]
  %4 = xla_tuple %s1, %s2, %s3
  $region1: #{custom-call.2} parent=0
    #allocation0 [shape = 'u8[4096]{0}', space=vmem, size = 0x1000, scoped, tag = 'operand span for operand 0']
    #allocation1 [shape = 'u8[2048]{0}', space=vmem, size = 0x800, scoped, tag = 'packed  for operand 0']
    #allocation2 [shape = 'u8[4096]{0}', space=vmem, size = 0x1000, scoped, tag = 'operand span for operand 1']
    #allocation3 [shape = 'u8[2048]{0}', space=vmem, size = 0x800, scoped, tag = 'packed  for operand 1']
    #allocation4 [shape = 'u8[4096]{0}', space=vmem, size = 0x1000, scoped, tag = 'operand span for operand 2']
    #allocation5 [shape = 'u8[512]{0}', space=vmem, size = 0x400, scoped, tag = 'packed  for operand 2']
    #allocation6 [shape = 's32[1]{0}', space=sflag, size = 0x4, scoped, tag = 'scoped memory for custom-call.2']
    #allocation7 [shape = 'u8[4096]{0}', space=vmem, size = 0x1000, scoped, tag = 'operand span for operand 3']
    #allocation8 [shape = 'u8[512]{0}', space=vmem, size = 0x400, scoped, tag = 'packed  for operand 3']
    #allocation9 [shape = 's32[1]{0}', space=sflag, size = 0x4, scoped, tag = 'scoped memory for custom-call.2']
    #allocation10 [shape = 's32[3,128]{1,0}', space=vmem, size = 0x1000, scoped, tag = 'scratch for permutations']
    %5 = vsyncpa [#allocation6], 0
    %6 = vsyncpa [#allocation9], 0
    %p8 = scmp.gt.s32.totalorder 4, 0
    // Predicated region
    $region2: #{custom-call.2} parent=1 // pred_check
      %p9 = pneg %p8
    $region3: #{custom-call.2} parent=1 // pred_check_branch
      %11 = sbr.rel (%p9) target = $region5
    $region4: #{custom-call.2} parent=1 // pred_region
      %s12 = sshra.s32 4, 3
      %p13 = scmp.gt.s32.totalorder %s12, 0
      // Predicated region
      $region6: #{custom-call.2} parent=4 // pred_check
        %p14 = pneg %p13
      $region7: #{custom-call.2} parent=4 // pred_check_branch
        %16 = sbr.rel (%p14) target = $region9
      $region8: #{custom-call.2} parent=4 // pred_region
        %s17 = ssub.s32 %s12, 1
        %s18 = smul.u32 %s17, 128
        %s19 = sshra.s32 %s18, 4
        %s20 = scalar_lea.vmem %s0, %s19
        %v21 = vld [vmem:[%s0] sm:$0xff]
        // While loop
        $region10: #{custom-call.2} parent=8 // loop_pre_header
          _
        $region11: #{custom-call.2} parent=8 // loop_header
          %s22 = sphi %s0, %s44
          %s23 = sphi [#allocation1], %s45
          %v24 = vphi %v21, %v46
          %s25 = ssub.s32 %s20, 64
          %p26 = scmp.gt.s32.totalorder %s22, %s25
        $region12: #{custom-call.2} parent=8 // loop_header_branch
          %28 = sbr.rel (%p26) target = $region16
        $region13: #{custom-call.2} parent=8 // loop_body
          %29 = vst [vmem:[%s23] sm:$0xff] %v24
          %v30 = vld [vmem:[%s22 + $0x8] sm:$0xff]
          %31 = vst [vmem:[%s23 + $0x8] sm:$0xff] %v30
          %v32 = vld [vmem:[%s22 + $0x10] sm:$0xff]
          %33 = vst [vmem:[%s23 + $0x10] sm:$0xff] %v32
          %v34 = vld [vmem:[%s22 + $0x18] sm:$0xff]
          %35 = vst [vmem:[%s23 + $0x18] sm:$0xff] %v34
          %v36 = vld [vmem:[%s22 + $0x20] sm:$0xff]
          %37 = vst [vmem:[%s23 + $0x20] sm:$0xff] %v36
          %v38 = vld [vmem:[%s22 + $0x28] sm:$0xff]
          %39 = vst [vmem:[%s23 + $0x28] sm:$0xff] %v38
          %v40 = vld [vmem:[%s22 + $0x30] sm:$0xff]
          %41 = vst [vmem:[%s23 + $0x30] sm:$0xff] %v40
          %v42 = vld [vmem:[%s22 + $0x38] sm:$0xff]
          %43 = vst [vmem:[%s23 + $0x38] sm:$0xff] %v42
        $region14: #{custom-call.2} parent=8 // loop_footer
          %s44 = scalar_lea.vmem %s22, 64
          %s45 = scalar_lea.vmem %s23, 64
          %v46 = vld [vmem:[%s22 + $0x40] sm:$0xff]
        $region15: #{custom-call.2} parent=8 // loop_footer_branch
          %47 = sbr.rel target = $region11
        $region16: #{custom-call.2} parent=8 // loop_exit
          _
        // While loop
        $region17: #{custom-call.2} parent=8 // loop_pre_header
          _
        $region18: #{custom-call.2} parent=8 // loop_header
          %s48 = sphi %s22, %s56
          %s49 = sphi %s23, %s57
          %v50 = vphi %v24, %v50
          %p51 = scmp.gt.s32.totalorder %s48, %s20
        $region19: #{custom-call.2} parent=8 // loop_header_branch
          %53 = sbr.rel (%p51) target = $region23
        $region20: #{custom-call.2} parent=8 // loop_body
          %v54 = vld [vmem:[%s48] sm:$0xff]
          %55 = vst [vmem:[%s49] sm:$0xff] %v54
        $region21: #{custom-call.2} parent=8 // loop_footer
          %s56 = scalar_lea.vmem %s48, 8
          %s57 = scalar_lea.vmem %s49, 8
        $region22: #{custom-call.2} parent=8 // loop_footer_branch
          %58 = sbr.rel target = $region18
        $region23: #{custom-call.2} parent=8 // loop_exit
          _
      $region9: #{custom-call.2} parent=4 // pred_fallthru
        _
      %s59 = sand.u32 4, 7
      %s60 = sshllo.u32 0, %s59
      %s61 = smul.u32 %s12, 128
      %s62 = sshra.s32 %s61, 4
      %s63 = scalar_lea.vmem [#allocation1], %s62
      %s64 = smul.u32 %s12, 128
      %s65 = sshra.s32 %s64, 4
      %s66 = scalar_lea.vmem %s0, %s65
      %v67 = vld [vmem:[%s66] sm:%s60]
      %68 = vst [vmem:[%s63] sm:%s60] %v67
    $region5: #{custom-call.2} parent=1 // pred_fallthru
      _
    %s70 = sshllo.u32 0, 4
    %v71 = vld [vmem:[#allocation1] sm:%s70]
    %72 = vst [vmem:[#allocation0] sm:%s70] %v71
    %v73 = vld [vmem:[#allocation0] sm:$0xff]
    %74 = vst [vmem:[#allocation2] sm:$0xff] %v73
    %75 = vst [vmem:[#allocation4] sm:$0x1] 0
    %v76 = vlaneseq
    %v77 = vshrl.u32 %v76, 7
    %v78 = vmov %v77
    %80 = vst [vmem:[#allocation10] sm:$0xff] %v78
    loop: start=0, step=1, limit=3
    $region25: #{custom-call.2} parent=1 // loop_pre_header
      _
    $region26: #{custom-call.2} parent=1 // loop_header
      %s82 = sphi 0, %s86
      %p83 = scmp.ge.s32.totalorder %s82, 3
    $region27: #{custom-call.2} parent=1 // loop_header_branch
      %85 = sbr.rel (%p83) target = $region31
    $region28: #{custom-call.2} parent=1 // loop_body
      %v87 = vstv %s82
      %v88 = vlaneseq
      %v89 = vshrl.u32 %v88, 7
      %v90 = vmov %v89
      %v91 = vld [vmem:[#allocation2] sm:$0xff]
      %v92 = vand.u32 2147483647, %v91
      %v94 = vstv %s82
      %vm95 = vcmp.ge.s32.totalorder %v90, %v94
      %vm96 = vcmp.lt.s32.totalorder %v90, 3
      %vm97 = vmand %vm95, %vm96
      %vm98 = vcmp.lt.f32.partialorder -inf, %v92
      %vm99 = vmand %vm97, %vm98
      %v100 = vsel %vm99, %v90, %v87
      %v101 = vsel %vm99, %v92, -inf
      %v102 = vrot.slane %v101, 1
      %v103 = vrot.slane %v100, 1
      %vm104 = vcmp.ge.f32.partialorder %v102, %v101
      %v105 = vsel %vm104, %v102, %v101
      %v106 = vsel %vm104, %v103, %v100
      %v107 = vrot.slane %v102, 1
      %v108 = vrot.slane %v103, 1
      %vm109 = vcmp.ge.f32.partialorder %v107, %v105
      %v110 = vsel %vm109, %v107, %v105
      %v111 = vsel %vm109, %v108, %v106
      %v112 = vrot.slane %v107, 1
      %v113 = vrot.slane %v108, 1
      %vm114 = vcmp.ge.f32.partialorder %v112, %v110
      %v115 = vsel %vm114, %v112, %v110
      %v116 = vsel %vm114, %v113, %v111
      %v117 = vrot.slane %v112, 1
      %v118 = vrot.slane %v113, 1
      %vm119 = vcmp.ge.f32.partialorder %v117, %v115
      %v120 = vsel %vm119, %v117, %v115
      %v121 = vsel %vm119, %v118, %v116
      %v122 = vrot.slane %v117, 1
      %v123 = vrot.slane %v118, 1
      %vm124 = vcmp.ge.f32.partialorder %v122, %v120
      %v125 = vsel %vm124, %v122, %v120
      %v126 = vsel %vm124, %v123, %v121
      %v127 = vrot.slane %v122, 1
      %v128 = vrot.slane %v123, 1
      %vm129 = vcmp.ge.f32.partialorder %v127, %v125
      %v130 = vsel %vm129, %v127, %v125
      %v131 = vsel %vm129, %v128, %v126
      %v132 = vrot.slane %v127, 1
      %v133 = vrot.slane %v128, 1
      %vm134 = vcmp.ge.f32.partialorder %v132, %v130
      %v135 = vsel %vm134, %v132, %v130
      %v136 = vsel %vm134, %v133, %v131
      %s137 = ssub.s32 128, %s82
      %138 = vrot.lane.b32.xlu0 %v136, %s137
      %v139 = vpop.permute.xlu0 %138
      %s140 = vtos %v139
      %v141 = vstv %s82
      %v142 = vlaneseq
      %v143 = vand.u32 %v142, 127
      %vm144 = vcmp.eq.s32.totalorder %v143, %v141
      %v145 = vstv %s140
      %v146 = vld [vmem:[#allocation4] ss:$0 sm:$0xff]
      %v147 = vsel %vm144, %v145, %v146
      %148 = vst [vmem:[#allocation4] sm:$0x1] %v147
      %s149 = scalar_lea.vmem [#allocation2], %s82
      %s150 = scalar_lea.vmem [#allocation2], %s140
      %v151 = vld [vmem:[%s149] ss:$0 sm:$0xff]
      %v152 = vld [vmem:[%s150] ss:$0 sm:$0xff]
      %153 = vst [vmem:[%s150] sm:$0x1] %v151
      %154 = vst [vmem:[%s149] sm:$0x1] %v152
      %s155 = scalar_lea.vmem [#allocation10], %s82
      %s156 = scalar_lea.vmem [#allocation10], %s140
      %v157 = vld [vmem:[%s155] ss:$0 sm:$0xff]
      %v158 = vld [vmem:[%s156] ss:$0 sm:$0xff]
      %159 = vst [vmem:[%s156] sm:$0x1] %v157
      %160 = vst [vmem:[%s155] sm:$0x1] %v158
      %vm161 = vcmp.ne.f32.partialorder %v152, 0.0
      %vm162 = vmand %vm144, %vm161
      %v163 = vsel %vm162, %v152, 1.0
      %v164 = vlaneseq
      %v165 = vand.u32 %v164, 127
      %v166 = vstv %s82
      %vm167 = vcmp.gt.s32.totalorder %v165, %v166
      %v168 = vsel %vm167, %v152, 0.0
      %v169 = vlaneseq
      %v170 = vshrl.u32 %v169, 7
      %v171 = vmov %v170
      %v172 = vld [vmem:[#allocation2] sm:$0xff]
      %v174 = vstv %s82
      %vm175 = vcmp.gt.s32.totalorder %v171, %v174
      %v176 = vsel %vm175, %v163, 1.0
      %v177 = vrcp.pop %v176
      %v178 = vmul.f32 %v172, %v177
      %vm179 = vmand %vm175, %vm144
      %v180 = vsel %vm179, %v178, 0.0
      %181 = vadd.xlane.f32.xlu0 %v180
      %v182 = vpop.xlane.xlu0 %181
      %v183 = vmul.f32 %v182, %v168
      %v184 = vsub.f32 %v178, %v183
      %185 = vst [vmem:[#allocation2] sm:$0xff] %v184
    $region29: #{custom-call.2} parent=1 // loop_footer
      %s86 = sadd.s32 1, %s82
    $region30: #{custom-call.2} parent=1 // loop_footer_branch
      %81 = sbr.rel target = $region26
    $region31: #{custom-call.2} parent=1 // loop_exit
      _
    %v186 = vld [vmem:[#allocation10] sm:$0xff]
    %s187 = scalar_lea.vmem [#allocation10], 8
    %s188 = scalar_lea.vmem [#allocation10], 16
    %s189 = scalar_lea.vmem [#allocation10], 24
    %s190 = scalar_lea.vmem [#allocation10], 32
    %s191 = scalar_lea.vmem [#allocation10], 40
    %s192 = scalar_lea.vmem [#allocation10], 48
    %s193 = scalar_lea.vmem [#allocation10], 56
    %s194 = scalar_lea.vmem [#allocation10], 64
    %s195 = scalar_lea.vmem [#allocation10], 72
    %s196 = scalar_lea.vmem [#allocation10], 80
    %s197 = scalar_lea.vmem [#allocation10], 88
    %s198 = scalar_lea.vmem [#allocation10], 96
    %s199 = scalar_lea.vmem [#allocation10], 104
    %s200 = scalar_lea.vmem [#allocation10], 112
    %s201 = scalar_lea.vmem [#allocation10], 120
    %202 = vxpose.xlu0.b32.start [1/16] %v186, 128
    %203 = vxpose.xlu0.b32.cont [2/16] 0, 128
    %204 = vxpose.xlu0.b32.cont [3/16] 0, 128
    %205 = vxpose.xlu0.b32.cont [4/16] 0, 128
    %206 = vxpose.xlu0.b32.cont [5/16] 0, 128
    %207 = vxpose.xlu0.b32.cont [6/16] 0, 128
    %208 = vxpose.xlu0.b32.cont [7/16] 0, 128
    %209 = vxpose.xlu0.b32.cont [8/16] 0, 128
    %210 = vxpose.xlu0.b32.cont [9/16] 0, 128
    %211 = vxpose.xlu0.b32.cont [10/16] 0, 128
    %212 = vxpose.xlu0.b32.cont [11/16] 0, 128
    %213 = vxpose.xlu0.b32.cont [12/16] 0, 128
    %214 = vxpose.xlu0.b32.cont [13/16] 0, 128
    %215 = vxpose.xlu0.b32.cont [14/16] 0, 128
    %216 = vxpose.xlu0.b32.cont [15/16] 0, 128
    %217 = vxpose.xlu0.b32.end [16/16] 0, 128
    %v218 = vpop.trf.xlu0
    %v219 = vpop.trf.xlu0
    %v220 = vpop.trf.xlu0
    %v221 = vpop.trf.xlu0
    %v222 = vpop.trf.xlu0
    %v223 = vpop.trf.xlu0
    %v224 = vpop.trf.xlu0
    %v225 = vpop.trf.xlu0
    %v226 = vpop.trf.xlu0
    %v227 = vpop.trf.xlu0
    %v228 = vpop.trf.xlu0
    %v229 = vpop.trf.xlu0
    %v230 = vpop.trf.xlu0
    %v231 = vpop.trf.xlu0
    %v232 = vpop.trf.xlu0
    %v233 = vpop.trf.xlu0
    %234 = vst [vmem:[#allocation7] sm:$0x1] %v218
    %s236 = sshllo.u32 0, 4
    %v238 = vld [vmem:[#allocation2] sm:%s236]
    %s239 = sshllo.u32 0, 4
    %240 = vst [vmem:[#allocation3] sm:%s239] %v238
    %s242 = sshllo.u32 0, 1
    %v244 = vld [vmem:[#allocation4] sm:%s242]
    %s245 = sshllo.u32 0, 1
    %246 = vst [vmem:[#allocation5] sm:%s245] %v244
    %s248 = sshllo.u32 0, 1
    %v250 = vld [vmem:[#allocation7] sm:%s248]
    %s251 = sshllo.u32 0, 1
    %252 = vst [vmem:[#allocation8] sm:%s251] %v250
    %p254 = scmp.gt.s32.totalorder 4, 0
    // Predicated region
    $region32: #{custom-call.2} parent=1 // pred_check
      %p255 = pneg %p254
    $region33: #{custom-call.2} parent=1 // pred_check_branch
      %257 = sbr.rel (%p255) target = $region35
    $region34: #{custom-call.2} parent=1 // pred_region
      %s258 = sshra.s32 4, 3
      %p259 = scmp.gt.s32.totalorder %s258, 0
      // Predicated region
      $region36: #{custom-call.2} parent=34 // pred_check
        %p260 = pneg %p259
      $region37: #{custom-call.2} parent=34 // pred_check_branch
        %262 = sbr.rel (%p260) target = $region39
      $region38: #{custom-call.2} parent=34 // pred_region
        %s263 = ssub.s32 %s258, 1
        %s264 = smul.u32 %s263, 128
        %s265 = sshra.s32 %s264, 4
        %s266 = scalar_lea.vmem [#allocation3], %s265
        %v267 = vld [vmem:[#allocation3] sm:$0xff]
        // While loop
        $region40: #{custom-call.2} parent=38 // loop_pre_header
          _
        $region41: #{custom-call.2} parent=38 // loop_header
          %s268 = sphi [#allocation3], %s290
          %s269 = sphi %s1, %s291
          %v270 = vphi %v267, %v292
          %s271 = ssub.s32 %s266, 64
          %p272 = scmp.gt.s32.totalorder %s268, %s271
        $region42: #{custom-call.2} parent=38 // loop_header_branch
          %274 = sbr.rel (%p272) target = $region46
        $region43: #{custom-call.2} parent=38 // loop_body
          %275 = vst [vmem:[%s269] sm:$0xff] %v270
          %v276 = vld [vmem:[%s268 + $0x8] sm:$0xff]
          %277 = vst [vmem:[%s269 + $0x8] sm:$0xff] %v276
          %v278 = vld [vmem:[%s268 + $0x10] sm:$0xff]
          %279 = vst [vmem:[%s269 + $0x10] sm:$0xff] %v278
          %v280 = vld [vmem:[%s268 + $0x18] sm:$0xff]
          %281 = vst [vmem:[%s269 + $0x18] sm:$0xff] %v280
          %v282 = vld [vmem:[%s268 + $0x20] sm:$0xff]
          %283 = vst [vmem:[%s269 + $0x20] sm:$0xff] %v282
          %v284 = vld [vmem:[%s268 + $0x28] sm:$0xff]
          %285 = vst [vmem:[%s269 + $0x28] sm:$0xff] %v284
          %v286 = vld [vmem:[%s268 + $0x30] sm:$0xff]
          %287 = vst [vmem:[%s269 + $0x30] sm:$0xff] %v286
          %v288 = vld [vmem:[%s268 + $0x38] sm:$0xff]
          %289 = vst [vmem:[%s269 + $0x38] sm:$0xff] %v288
        $region44: #{custom-call.2} parent=38 // loop_footer
          %s290 = scalar_lea.vmem %s268, 64
          %s291 = scalar_lea.vmem %s269, 64
          %v292 = vld [vmem:[%s268 + $0x40] sm:$0xff]
        $region45: #{custom-call.2} parent=38 // loop_footer_branch
          %293 = sbr.rel target = $region41
        $region46: #{custom-call.2} parent=38 // loop_exit
          _
        // While loop
        $region47: #{custom-call.2} parent=38 // loop_pre_header
          _
        $region48: #{custom-call.2} parent=38 // loop_header
          %s294 = sphi %s268, %s302
          %s295 = sphi %s269, %s303
          %v296 = vphi %v270, %v296
          %p297 = scmp.gt.s32.totalorder %s294, %s266
        $region49: #{custom-call.2} parent=38 // loop_header_branch
          %299 = sbr.rel (%p297) target = $region53
        $region50: #{custom-call.2} parent=38 // loop_body
          %v300 = vld [vmem:[%s294] sm:$0xff]
          %301 = vst [vmem:[%s295] sm:$0xff] %v300
        $region51: #{custom-call.2} parent=38 // loop_footer
          %s302 = scalar_lea.vmem %s294, 8
          %s303 = scalar_lea.vmem %s295, 8
        $region52: #{custom-call.2} parent=38 // loop_footer_branch
          %304 = sbr.rel target = $region48
        $region53: #{custom-call.2} parent=38 // loop_exit
          _
      $region39: #{custom-call.2} parent=34 // pred_fallthru
        _
      %s305 = sand.u32 4, 7
      %s306 = sshllo.u32 0, %s305
      %s307 = smul.u32 %s258, 128
      %s308 = sshra.s32 %s307, 4
      %s309 = scalar_lea.vmem %s1, %s308
      %s310 = smul.u32 %s258, 128
      %s311 = sshra.s32 %s310, 4
      %s312 = scalar_lea.vmem [#allocation3], %s311
      %v313 = vld [vmem:[%s312] sm:%s306]
      %314 = vst [vmem:[%s309] sm:%s306] %v313
    $region35: #{custom-call.2} parent=1 // pred_fallthru
      _
    // Predicated region
    $region54: #{custom-call.2} parent=1 // pred_check
      _
    $region55: #{custom-call.2} parent=1 // pred_check_branch
      %316 = sbr.rel (0) target = $region57
    $region56: #{custom-call.2} parent=1 // pred_region
      %s318 = ssub.s32 16, 16
      %319 = vsyncadd [#allocation6], %s318
      %s320 = sshll.u32 [#allocation5], 4
      %s321 = int_to_ptr.vmem [resolvable:$true] %s320
      %323 = dma.vmem_to_hbm [thread:$0]  %s321, 16, %s2, [#allocation6]
    $region57: #{custom-call.2} parent=1 // pred_fallthru
      _
    // Predicated region
    $region58: #{custom-call.2} parent=1 // pred_check
      _
    $region59: #{custom-call.2} parent=1 // pred_check_branch
      %325 = sbr.rel (0) target = $region61
    $region60: #{custom-call.2} parent=1 // pred_region
      %s327 = ssub.s32 16, 16
      %328 = vsyncadd [#allocation9], %s327
      %s329 = sshll.u32 [#allocation8], 4
      %s330 = int_to_ptr.vmem [resolvable:$true] %s329
      %332 = dma.vmem_to_hbm [thread:$0]  %s330, 16, %s3, [#allocation9]
    $region61: #{custom-call.2} parent=1 // pred_fallthru
      _
    // Predicated region
    $region62: #{custom-call.2} parent=1 // pred_check
      _
    $region63: #{custom-call.2} parent=1 // pred_check_branch
      %334 = sbr.rel (0) target = $region65
    $region64: #{custom-call.2} parent=1 // pred_region
      %335 = dma.done [#allocation6], 16
    $region65: #{custom-call.2} parent=1 // pred_fallthru
      _
    // Predicated region
    $region66: #{custom-call.2} parent=1 // pred_check
      _
    $region67: #{custom-call.2} parent=1 // pred_check_branch
      %337 = sbr.rel (0) target = $region69
    $region68: #{custom-call.2} parent=1 // pred_region
      %338 = dma.done [#allocation9], 16
    $region69: #{custom-call.2} parent=1 // pred_fallthru
      _
    %339 = vsyncpa [#allocation6], 1
    %340 = vsyncpa [#allocation9], 1

// kernel: naive_linear_forward.1
$region0: #{naive_linear_forward.1}
  #allocation0 [shape = 'u32[]', space=smem, size = 0x4, offset = 0x4, fixed_abs, tag = 'smem constant byte address 0x4 - core index']
  #allocation1 [shape = 'u32[144,128]{1,0:T(1,128)}', space=vmem, size = 0x12000, scoped, tag = 'internal scratch']
  %s0 = inlined_call_operand.vmem [shape: f32[3,3], index: 0, kind: input, shape index: {}]
  %s1 = inlined_call_operand.vmem [shape: f32[3], index: 1, kind: input, shape index: {}]
  %s2 = inlined_call_operand.vmem [shape: f32[3,4,128], index: 2, kind: input, shape index: {}]
  %s3 = inlined_call_operand.vmem [shape: f32[3,4,128], index: 3, kind: output, shape index: {}]
  %s4 = sld [smem:[#allocation0]]
  $region30: #{naive_linear_forward.1} parent=0
    _
  %s6 = ssub.s32 1, %s4
  %s7 = scalar_select 0, %s6, %s4
  $region1: #{naive_linear_forward.1} parent=0
    #allocation2 [shape = 'u8[2048]{0}', space=smem, size = 0x800, scoped, tag = 'input window, operand 0, single buffered']
    #allocation3 [shape = 's32[1]{0}', space=sflag, size = 0x4, scoped, tag = 'scoped memory for naive_linear_forward.1']
    #allocation4 [shape = 'u8[512]{0}', space=smem, size = 0x200, scoped, tag = 'input window, operand 1, single buffered']
    #allocation5 [shape = 's32[1]{0}', space=sflag, size = 0x4, scoped, tag = 'scoped memory for naive_linear_forward.1']
    %8 = vsyncpa [#allocation3], 0
    %9 = vsyncpa [#allocation5], 0
    // Predicated region
    $region2: #{naive_linear_forward.1} parent=1 // pred_check
      _
    $region3: #{naive_linear_forward.1} parent=1 // pred_check_branch
      %11 = sbr.rel (0) target = $region5
    $region4: #{naive_linear_forward.1} parent=1 // pred_region
      %s13 = ssub.s32 64, 64
      %14 = vsyncadd [#allocation3], %s13
      %s16 = sshll.u32 %s0, 4
      %s17 = int_to_ptr.vmem [resolvable:$true] %s16
      %19 = dma.vmem_to_smem %s17, 64, [#allocation2], [#allocation3]
    $region5: #{naive_linear_forward.1} parent=1 // pred_fallthru
      _
    // Predicated region
    $region6: #{naive_linear_forward.1} parent=1 // pred_check
      _
    $region7: #{naive_linear_forward.1} parent=1 // pred_check_branch
      %21 = sbr.rel (0) target = $region9
    $region8: #{naive_linear_forward.1} parent=1 // pred_region
      %s23 = ssub.s32 16, 16
      %24 = vsyncadd [#allocation5], %s23
      %s26 = sshll.u32 %s1, 4
      %s27 = int_to_ptr.vmem [resolvable:$true] %s26
      %29 = dma.vmem_to_smem %s27, 16, [#allocation4], [#allocation5]
    $region9: #{naive_linear_forward.1} parent=1 // pred_fallthru
      _
    // Predicated region
    $region10: #{naive_linear_forward.1} parent=1 // pred_check
      _
    $region11: #{naive_linear_forward.1} parent=1 // pred_check_branch
      %31 = sbr.rel (0) target = $region13
    $region12: #{naive_linear_forward.1} parent=1 // pred_region
      _
    $region13: #{naive_linear_forward.1} parent=1 // pred_fallthru
      _
    // Predicated region
    $region14: #{naive_linear_forward.1} parent=1 // pred_check
      _
    $region15: #{naive_linear_forward.1} parent=1 // pred_check_branch
      %33 = sbr.rel (0) target = $region17
    $region16: #{naive_linear_forward.1} parent=1 // pred_region
      %34 = dma.done [#allocation3], 64
    $region17: #{naive_linear_forward.1} parent=1 // pred_fallthru
      _
    // Predicated region
    $region18: #{naive_linear_forward.1} parent=1 // pred_check
      _
    $region19: #{naive_linear_forward.1} parent=1 // pred_check_branch
      %36 = sbr.rel (0) target = $region21
    $region20: #{naive_linear_forward.1} parent=1 // pred_region
      %37 = dma.done [#allocation5], 16
    $region21: #{naive_linear_forward.1} parent=1 // pred_fallthru
      _
    %38 = sfence
    %v39 = vld [vmem:[%s2] sm:$0xf]
    %s40 = scalar_lea.vmem %s2, 4
    %v41 = vld [vmem:[%s40] sm:$0xf]
    %s42 = scalar_lea.vmem %s2, 8
    %v43 = vld [vmem:[%s42] sm:$0xf]
    %s44 = sld [smem:[#allocation2]]
    %v45 = vstv %s44
    %v46 = vmul.f32 %v39, %v45
    %s47 = sld [smem:[#allocation4]]
    %v48 = vstv %s47
    %v49 = vadd.f32 %v46, %v48
    %s50 = sld [smem:[#allocation2 + $0x1]]
    %v51 = vstv %s50
    %v52 = vmul.f32 %v41, %v51
    %v53 = vadd.f32 %v49, %v52
    %s54 = sld [smem:[#allocation2 + $0x2]]
    %v55 = vstv %s54
    %v56 = vmul.f32 %v43, %v55
    %v57 = vadd.f32 %v53, %v56
    %58 = vst [vmem:[%s3] sm:$0xf] %v57
    %s59 = sld [smem:[#allocation2 + $0x80]]
    %v60 = vstv %s59
    %v61 = vmul.f32 %v39, %v60
    %s62 = sld [smem:[#allocation4 + $0x1]]
    %v63 = vstv %s62
    %v64 = vadd.f32 %v61, %v63
    %s65 = sld [smem:[#allocation2 + $0x81]]
    %v66 = vstv %s65
    %v67 = vmul.f32 %v41, %v66
    %v68 = vadd.f32 %v64, %v67
    %s69 = sld [smem:[#allocation2 + $0x82]]
    %v70 = vstv %s69
    %v71 = vmul.f32 %v43, %v70
    %v72 = vadd.f32 %v68, %v71
    %s73 = scalar_lea.vmem %s3, 4
    %74 = vst [vmem:[%s73] sm:$0xf] %v72
    %s75 = sld [smem:[#allocation2 + $0x100]]
    %v76 = vstv %s75
    %v77 = vmul.f32 %v39, %v76
    %s78 = sld [smem:[#allocation4 + $0x2]]
    %v79 = vstv %s78
    %v80 = vadd.f32 %v77, %v79
    %s81 = sld [smem:[#allocation2 + $0x101]]
    %v82 = vstv %s81
    %v83 = vmul.f32 %v41, %v82
    %v84 = vadd.f32 %v80, %v83
    %s85 = sld [smem:[#allocation2 + $0x102]]
    %v86 = vstv %s85
    %v87 = vmul.f32 %v43, %v86
    %v88 = vadd.f32 %v84, %v87
    %s89 = scalar_lea.vmem %s3, 8
    %90 = vst [vmem:[%s89] sm:$0xf] %v88
    // Predicated region
    $region22: #{naive_linear_forward.1} parent=1 // pred_check
      _
    $region23: #{naive_linear_forward.1} parent=1 // pred_check_branch
      %92 = sbr.rel (0) target = $region25
    $region24: #{naive_linear_forward.1} parent=1 // pred_region
      _
    $region25: #{naive_linear_forward.1} parent=1 // pred_fallthru
      _
    // Predicated region
    $region26: #{naive_linear_forward.1} parent=1 // pred_check
      _
    $region27: #{naive_linear_forward.1} parent=1 // pred_check_branch
      %94 = sbr.rel (0) target = $region29
    $region28: #{naive_linear_forward.1} parent=1 // pred_region
      _
    $region29: #{naive_linear_forward.1} parent=1 // pred_fallthru
      _
    %95 = vsyncpa [#allocation3], 1
    %96 = vsyncpa [#allocation5], 1

</llo_original>
